<compile_context>
chip_gen: v7x
topology: tpu7x:2x2x1
jax: 0.10.0
libtpu: 0.0.40
codegen_flags: <defaults>
</compile_context>

<pallas_src>
import functools

import jax
import jax.numpy as jnp
from jax import lax
from jax.experimental import pallas as pl
from jax.experimental.pallas import tpu as pltpu


def _round_up(n, m):
    return (n + m - 1) // m * m


def _spigot_fwd_kernel(s_ref, x_ref, y_ref, w_ref, nll_ref, zidx_ref, *,
                       num_classes, matmul_dtype):
    # Batch is on the 128-lane axis; features / classes are on sublanes.
    s = s_ref[...].astype(jnp.float32)                        # (K, tb)
    k, tb = s.shape

    # ---- hard argmax over the feature axis (first-occurrence tie-break) ----
    m = jnp.max(s, axis=0, keepdims=True)                     # (1, tb)
    rowk = lax.broadcasted_iota(jnp.int32, (k, tb), 0)        # (K, tb)
    cand = jnp.where(s == m, rowk, k)                         # non-max -> K
    idx = jnp.min(cand, axis=0, keepdims=True)                # (1, tb) first argmax
    z = (rowk == idx).astype(matmul_dtype)                    # one-hot columns (K, tb)

    # ---- fused linear decoder: logits^T = W_cat^T @ [X^T ; z] -------------
    # (bias already folded into the W_z rows by prepare_decoder_weights)
    xz = jnp.concatenate([x_ref[...].astype(matmul_dtype), z], axis=0)  # (Dx+K, tb)
    logits = jnp.dot(w_ref[...], xz,
                     preferred_element_type=jnp.float32)      # (Cpad, tb) f32

    cpad = logits.shape[0]
    rowc = lax.broadcasted_iota(jnp.int32, (cpad, tb), 0)     # (Cpad, tb)
    if num_classes != cpad:                                   # static branch
        logits = jnp.where(rowc < num_classes, logits, -1e30)

    # ---- per-example cross-entropy vs integer labels -----------------------
    mx = jnp.max(logits, axis=0, keepdims=True)               # (1, tb)
    lse = mx + jnp.log(jnp.sum(jnp.exp(logits - mx), axis=0, keepdims=True))
    y = y_ref[...]                                            # (1, tb) int32
    tgt = jnp.sum(jnp.where(rowc == y, logits, 0.0), axis=0, keepdims=True)

    # Lane-dense stores: one unmasked vst per output per tile.
    nll_ref[...] = lse - tgt                                  # (1, tb) f32
    zidx_ref[...] = idx                                       # (1, tb) int32


def prepare_decoder_weights(w_x, w_z, b, *, matmul_dtype=jnp.float32):
    """One-time decoder-parameter prep (hoisted out of the per-call path).

    Folds the bias into W_z (exact: one-hot rows of z sum to 1, so
    z @ (W_z + 1 b^T) == z @ W_z + b), fuses [W_x ; W_z] into a single matrix,
    pads the class dim to a lane-dense multiple of 128, transposes so classes
    sit on sublanes, and pre-casts to matmul_dtype (bf16 recommended on
    v6e/v7x; f32 for near-bit-parity with the PyTorch module).
    """
    dx, c = w_x.shape
    k = w_z.shape[0]
    c_pad = max(128, _round_up(c, 128))
    wz_b = w_z.astype(jnp.float32) + b.astype(jnp.float32)[None, :]      # (K, C)
    w_cat = jnp.concatenate([w_x.astype(jnp.float32), wz_b], axis=0)      # (Dx+K, C)
    w_full = jnp.zeros((dx + k, c_pad), jnp.float32).at[:, :c].set(w_cat)
    return jnp.transpose(w_full).astype(matmul_dtype)                      # (Cpad, Dx+K)


def spigot_eg_argmax_forward(s, X, y, w_cat_t, num_classes, *, batch_tile=512):
    """Forward pass of spigot_eg_argmax: returns (scalar mean CE loss, one-hot z).

    `w_cat_t` comes from prepare_decoder_weights (shape (Cpad, Dx+K)).
    """
    B, K = s.shape
    Dx = X.shape[1]
    c_pad, dcat = w_cat_t.shape
    assert dcat == Dx + K, (w_cat_t.shape, Dx, K)
    matmul_dtype = w_cat_t.dtype

    # --- batch tile: multiple of 128 (batch lives on lanes), large by default,
    #     but clamped so grid >= 2 whenever B > 128 (v7x megacore). ------------
    tb = _round_up(max(128, min(batch_tile, B)), 128)
    if B > 128:
        tb = min(tb, _round_up((B + 1) // 2, 128))
    b_pad = _round_up(B, tb)
    grid = b_pad // tb
    pad = b_pad - B

    # Transposed, lane-padded inputs (cheap XLA transposes at these widths).
    s_t = jnp.pad(jnp.transpose(s), ((0, 0), (0, pad)))                 # (K, b_pad)
    x_t = jnp.pad(jnp.transpose(X), ((0, 0), (0, pad)))                 # (Dx, b_pad)
    y_t = jnp.pad(y.astype(jnp.int32).reshape(1, B), ((0, 0), (0, pad)))  # (1, b_pad)

    kernel = functools.partial(_spigot_fwd_kernel, num_classes=num_classes,
                               matmul_dtype=matmul_dtype)

    def lane_tiled(rows):
        return pl.BlockSpec((rows, tb), lambda i: (0, i))

    nll, zidx = pl.pallas_call(
        kernel,
        out_shape=(jax.ShapeDtypeStruct((1, b_pad), jnp.float32),
                   jax.ShapeDtypeStruct((1, b_pad), jnp.int32)),
        grid_spec=pltpu.PrefetchScalarGridSpec(
            num_scalar_prefetch=0,
            grid=(grid,),
            in_specs=[lane_tiled(K),        # s^T        (tiled over batch lanes)
                      lane_tiled(Dx),       # X^T        (tiled over batch lanes)
                      lane_tiled(1),        # labels     (tiled over batch lanes)
                      pl.BlockSpec((c_pad, Dx + K), lambda i: (0, 0))],  # fused W, VMEM-resident
            out_specs=[lane_tiled(1),       # per-example NLL
                       lane_tiled(1)],      # per-example argmax index
        ),
        compiler_params=pltpu.CompilerParams(
            dimension_semantics=("parallel",),
            # Toy per-step footprint is <1 MiB; 32 MiB leaves large headroom
            # even for v7x's 64 MiB VMEM if decoder widths grow.
            vmem_limit_bytes=32 * 1024 * 1024),
    )(s_t, x_t, y_t, w_cat_t)

    loss = jnp.sum(nll[0, :B]) / jnp.float32(B)
    z = jax.nn.one_hot(zidx[0, :B], K, dtype=jnp.float32)
    return loss, z


def _reference(s, X, y, w_z, w_x, b, num_classes):
    z = jax.nn.one_hot(jnp.argmax(s, axis=-1), s.shape[-1], dtype=jnp.float32)
    logits = X @ w_x + z @ w_z + b
    logp = jax.nn.log_softmax(logits, axis=-1)
    y1h = jax.nn.one_hot(y, num_classes, dtype=jnp.float32)
    return -jnp.sum(y1h * logp) / s.shape[0], z


if __name__ == "__main__":
    # Small synthetic shapes; B=200 exercises multi-tile grid + ragged padding.
    B, K, Dx, C = 200, 16, 32, 8
    key = jax.random.PRNGKey(0)
    k_s, k_x, k_y, k_wz, k_wx, k_b = jax.random.split(key, 6)

    s = jax.random.normal(k_s, (B, K), dtype=jnp.float32)      # latent scores
    X = jax.random.normal(k_x, (B, Dx), dtype=jnp.float32)     # input features
    y = jax.random.randint(k_y, (B,), 0, C, dtype=jnp.int32)   # targets

    # Deterministically initialized decoder (linear on concat([X, z])).
    w_z = 0.1 * jax.random.normal(k_wz, (K, C), dtype=jnp.float32)
    w_x = 0.1 * jax.random.normal(k_wx, (Dx, C), dtype=jnp.float32)
    b = 0.01 * jax.random.normal(k_b, (C,), dtype=jnp.float32)

    # One-time parameter prep (use matmul_dtype=jnp.bfloat16 on v6e/v7x for speed).
    w_cat_t = prepare_decoder_weights(w_x, w_z, b, matmul_dtype=jnp.float32)

    loss, z = spigot_eg_argmax_forward(s, X, y, w_cat_t, C)
    jax.block_until_ready((loss, z))

    ref_loss, ref_z = _reference(s, X, y, w_z, w_x, b, C)
    assert jnp.allclose(loss, ref_loss, atol=1e-5, rtol=1e-5), (loss, ref_loss)
    assert jnp.array_equal(z, ref_z)

    print("KERNEL_OK")
</pallas_src>

<mosaic_0001>
module attributes {stable_mosaic.version = 11 : i64} {
  func.func @_spigot_fwd_kernel(%arg0: i32, %arg1: memref<16x128xf32, #tpu.memory_space<vmem>>, %arg2: memref<32x128xf32, #tpu.memory_space<vmem>>, %arg3: memref<1x128xi32, #tpu.memory_space<vmem>>, %arg4: memref<128x48xf32, #tpu.memory_space<vmem>>, %arg5: memref<1x128xf32, #tpu.memory_space<vmem>>, %arg6: memref<1x128xi32, #tpu.memory_space<vmem>>) attributes {dimension_semantics = [#tpu.dimension_semantics<parallel>], iteration_bounds = array<i64: 2>, scalar_prefetch = 0 : i64, scratch_operands = 0 : i64, tpu.core_type = #tpu.core_type<tc>, window_params = [{transform_indices = @transform_0, window_bounds = array<i64: 16, 128>}, {transform_indices = @transform_1, window_bounds = array<i64: 32, 128>}, {transform_indices = @transform_2, window_bounds = array<i64: 1, 128>}, {pipeline_mode = #tpu.pipeline_mode<synchronous>, transform_indices = @transform_3, window_bounds = array<i64: 128, 48>}, {transform_indices = @transform_4, window_bounds = array<i64: 1, 128>}, {transform_indices = @transform_5, window_bounds = array<i64: 1, 128>}]} {
    %c0 = arith.constant 0 : index
    %c0_0 = arith.constant 0 : index
    %0 = vector.load %arg1[%c0, %c0_0] : memref<16x128xf32, #tpu.memory_space<vmem>>, vector<16x128xf32>
    %cst = arith.constant dense<0xFF800000> : vector<128xf32>
    %1 = vector.multi_reduction <maximumf>, %0, %cst [0] : vector<16x128xf32> to vector<128xf32>
    %2 = vector.shape_cast %1 : vector<128xf32> to vector<1x128xf32>
    %3 = tpu.iota {dimensions = array<i32: 0>} : vector<16x128xi32>
    %4 = vector.broadcast %2 : vector<1x128xf32> to vector<16x128xf32>
    %5 = arith.cmpf oeq, %0, %4 : vector<16x128xf32>
    %c16_i32 = arith.constant 16 : i32
    %6 = vector.broadcast %c16_i32 : i32 to vector<16x128xi32>
    %7 = arith.select %5, %3, %6 : vector<16x128xi1>, vector<16x128xi32>
    %cst_1 = arith.constant dense<2147483647> : vector<128xi32>
    %8 = vector.multi_reduction <minsi>, %7, %cst_1 [0] : vector<16x128xi32> to vector<128xi32>
    %9 = vector.shape_cast %8 : vector<128xi32> to vector<1x128xi32>
    %10 = vector.broadcast %9 : vector<1x128xi32> to vector<16x128xi32>
    %11 = arith.cmpi eq, %3, %10 : vector<16x128xi32>
    %12 = arith.extui %11 : vector<16x128xi1> to vector<16x128xi32>
    %13 = arith.sitofp %12 : vector<16x128xi32> to vector<16x128xf32>
    %c0_2 = arith.constant 0 : index
    %c0_3 = arith.constant 0 : index
    %14 = vector.load %arg2[%c0_2, %c0_3] : memref<32x128xf32, #tpu.memory_space<vmem>>, vector<32x128xf32>
    %15 = tpu.concatenate %14, %13 in 0 : vector<32x128xf32>, vector<16x128xf32> -> vector<48x128xf32>
    %c0_4 = arith.constant 0 : index
    %c0_5 = arith.constant 0 : index
    %16 = vector.load %arg4[%c0_4, %c0_5] : memref<128x48xf32, #tpu.memory_space<vmem>>, vector<128x48xf32>
    %cst_6 = arith.constant dense<0.000000e+00> : vector<128x128xf32>
    %17 = tpu.matmul %16, %15, %cst_6 {dimension_numbers = #tpu.dot_dimension_numbers<[1], [0], [0], [1], [0, 0, 1, 1], [], []>} : vector<128x48xf32>, vector<48x128xf32>, vector<128x128xf32> -> vector<128x128xf32>
    %18 = tpu.iota {dimensions = array<i32: 0>} : vector<128x128xi32>
    %c8_i32 = arith.constant 8 : i32
    %19 = vector.broadcast %c8_i32 : i32 to vector<128x128xi32>
    %20 = arith.cmpi slt, %18, %19 : vector<128x128xi32>
    %cst_7 = arith.constant -1.000000e+30 : f32
    %21 = vector.broadcast %cst_7 : f32 to vector<128x128xf32>
    %22 = arith.select %20, %17, %21 : vector<128x128xi1>, vector<128x128xf32>
    %cst_8 = arith.constant dense<0xFF800000> : vector<128xf32>
    %23 = vector.multi_reduction <maximumf>, %22, %cst_8 [0] : vector<128x128xf32> to vector<128xf32>
    %24 = vector.shape_cast %23 : vector<128xf32> to vector<1x128xf32>
    %25 = vector.broadcast %24 : vector<1x128xf32> to vector<128x128xf32>
    %26 = arith.subf %22, %25 : vector<128x128xf32>
    %27 = math.exp %26 : vector<128x128xf32>
    %cst_9 = arith.constant dense<0.000000e+00> : vector<128xf32>
    %28 = vector.multi_reduction <add>, %27, %cst_9 [0] : vector<128x128xf32> to vector<128xf32>
    %29 = vector.shape_cast %28 : vector<128xf32> to vector<1x128xf32>
    %30 = math.log %29 : vector<1x128xf32>
    %31 = arith.addf %24, %30 : vector<1x128xf32>
    %c0_10 = arith.constant 0 : index
    %c0_11 = arith.constant 0 : index
    %32 = vector.load %arg3[%c0_10, %c0_11] : memref<1x128xi32, #tpu.memory_space<vmem>>, vector<1x128xi32>
    %33 = vector.broadcast %32 : vector<1x128xi32> to vector<128x128xi32>
    %34 = arith.cmpi eq, %18, %33 : vector<128x128xi32>
    %cst_12 = arith.constant 0.000000e+00 : f32
    %35 = vector.broadcast %cst_12 : f32 to vector<128x128xf32>
    %36 = arith.select %34, %22, %35 : vector<128x128xi1>, vector<128x128xf32>
    %cst_13 = arith.constant dense<0.000000e+00> : vector<128xf32>
    %37 = vector.multi_reduction <add>, %36, %cst_13 [0] : vector<128x128xf32> to vector<128xf32>
    %38 = vector.shape_cast %37 : vector<128xf32> to vector<1x128xf32>
    %39 = arith.subf %31, %38 : vector<1x128xf32>
    %c0_14 = arith.constant 0 : index
    %c0_15 = arith.constant 0 : index
    %40 = vector.load %arg5[%c0_14, %c0_15] : memref<1x128xf32, #tpu.memory_space<vmem>>, vector<1x128xf32>
    tpu.vector_store %arg5[%c0_14, %c0_15], %39 {strides = array<i32>} : memref<1x128xf32, #tpu.memory_space<vmem>>, vector<1x128xf32>,
    %c0_16 = arith.constant 0 : index
    %c0_17 = arith.constant 0 : index
    %41 = vector.load %arg6[%c0_16, %c0_17] : memref<1x128xi32, #tpu.memory_space<vmem>>, vector<1x128xi32>
    tpu.vector_store %arg6[%c0_16, %c0_17], %9 {strides = array<i32>} : memref<1x128xi32, #tpu.memory_space<vmem>>, vector<1x128xi32>,
    return
  }
  func.func @transform_0(%arg0: i32) -> (i32, i32) {
    %c0_i32 = arith.constant 0 : i32
    %c0_i32_0 = arith.constant 0 : i32
    return %c0_i32, %arg0 : i32, i32
  }
  func.func @transform_1(%arg0: i32) -> (i32, i32) {
    %c0_i32 = arith.constant 0 : i32
    %c0_i32_0 = arith.constant 0 : i32
    return %c0_i32, %arg0 : i32, i32
  }
  func.func @transform_2(%arg0: i32) -> (i32, i32) {
    %c0_i32 = arith.constant 0 : i32
    %c0_i32_0 = arith.constant 0 : i32
    return %c0_i32, %arg0 : i32, i32
  }
  func.func @transform_3(%arg0: i32) -> (i32, i32) {
    %c0_i32 = arith.constant 0 : i32
    %c0_i32_0 = arith.constant 0 : i32
    %c0_i32_1 = arith.constant 0 : i32
    return %c0_i32, %c0_i32_0 : i32, i32
  }
  func.func @transform_4(%arg0: i32) -> (i32, i32) {
    %c0_i32 = arith.constant 0 : i32
    %c0_i32_0 = arith.constant 0 : i32
    return %c0_i32, %arg0 : i32, i32
  }
  func.func @transform_5(%arg0: i32) -> (i32, i32) {
    %c0_i32 = arith.constant 0 : i32
    %c0_i32_0 = arith.constant 0 : i32
    return %c0_i32, %arg0 : i32, i32
  }
}

</mosaic_0001>

<llo_original>
// kernel: tpu_custom_call.1
$region0: #{tpu_custom_call.1}
  #allocation0 [shape = 'u32[]', space=smem, size = 0x4, offset = 0x4, fixed_abs, tag = 'smem constant byte address 0x4 - core index']
  #allocation1 [shape = 'u32[144,128]{1,0:T(1,128)}', space=vmem, size = 0x12000, scoped, tag = 'internal scratch']
  %s0 = inlined_call_operand.vmem [shape: f32[16,256], index: 0, kind: input, shape index: {}]
  %s1 = inlined_call_operand.vmem [shape: f32[32,256], index: 1, kind: input, shape index: {}]
  %s2 = inlined_call_operand.vmem [shape: s32[1,256], index: 2, kind: input, shape index: {}]
  %s3 = inlined_call_operand.vmem [shape: f32[128,48], index: 3, kind: input, shape index: {}]
  %s4 = inlined_call_operand.hbm [shape: f32[1,256], index: 4, kind: output, shape index: {0}]
  %s5 = inlined_call_operand.hbm [shape: s32[1,256], index: 5, kind: output, shape index: {1}]
  %6 = xla_tuple %s4, %s5
  %s7 = sld [smem:[#allocation0]]
  $region133: #{tpu_custom_call.1} parent=0
    _
  %s9 = ssub.s32 1, %s7
  %s10 = scalar_select 0, %s9, %s7
  $region1: #{tpu_custom_call.1} parent=0
    #allocation2 [shape = 'u8[16384]{0}', space=vmem, size = 0x4000, scoped, tag = 'input window, operand 0']
    #allocation3 [shape = 'u8[32768]{0}', space=vmem, size = 0x8000, scoped, tag = 'input window, operand 1']
    #allocation4 [shape = 'u8[1024]{0}', space=vmem, size = 0x400, scoped, tag = 'output window, operand 0']
    #allocation5 [shape = 's32[2]{0}', space=sflag, size = 0x8, scoped, tag = 'scoped memory for tpu_custom_call.1']
    #allocation6 [shape = 'u8[1024]{0}', space=vmem, size = 0x400, scoped, tag = 'output window, operand 1']
    #allocation7 [shape = 's32[2]{0}', space=sflag, size = 0x8, scoped, tag = 'scoped memory for tpu_custom_call.1']
    %11 = vsyncpa [#allocation5], 0
    %s12 = scalar_lea.sflag [#allocation5], 1
    %13 = vsyncpa %s12, 0
    %14 = vsyncpa [#allocation7], 0
    %s15 = scalar_lea.sflag [#allocation7], 1
    %16 = vsyncpa %s15, 0
    loop: start=0, step=1, limit=4
    $region2: #{tpu_custom_call.1} parent=1 // loop_pre_header
      _
    $region3: #{tpu_custom_call.1} parent=1 // loop_header
      %s18 = sphi 0, %s22
      %p19 = scmp.ge.s32.totalorder %s18, 4
      %s28 = sphi 0, %s30
      %s31 = sphi 0, %s28
      %s32 = sphi 0, %s31
      %s48 = sphi 0, %s32
      %s54 = sphi 0, %s56
      %s57 = sphi 0, %s54
      %s58 = sphi 0, %s57
      %s74 = sphi 0, %s58
      %s80 = sphi 0, %s82
      %s83 = sphi 0, %s80
      %s84 = sphi 0, %s83
      %s100 = sphi 0, %s84
      %s104 = sphi 0, %s104
      %s106 = sphi 0, %s104
      %s107 = sphi 0, %s106
      %s121 = sphi 0, %s107
      %s127 = sphi 0, %s129
      %s130 = sphi 0, %s127
      %s131 = sphi 0, %s130
      %s147 = sphi 0, %s131
      %s153 = sphi 0, %s155
      %s156 = sphi 0, %s153
      %s157 = sphi 0, %s156
      %s173 = sphi 0, %s157
    $region4: #{tpu_custom_call.1} parent=1 // loop_header_branch
      %21 = sbr.rel (%p19) target = $region8
    $region5: #{tpu_custom_call.1} parent=1 // loop_body
      %s23 = ssub.s32 %s18, 1
      %s24 = ssub.s32 %s18, 2
      %s25 = sadd.s32 %s18, 1
      %s26 = ssub.s32 %s18, %s25
      %p27 = scmp.eq.s32.totalorder %s26, 0
      %s29 = sadd.s32 %s28, 1
      %s30 = scalar_select %p27, %s28, %s29
      %p33 = pneg %p27
      %p34 = scmp.eq.s32.totalorder %s18, 1
      %p35 = por %p33, %p34
      %p36 = scmp.ne.s32.totalorder %s28, %s31
      %p37 = scmp.eq.s32.totalorder %s18, 0
      %p38 = por %p36, %p37
      %p39 = scmp.ne.s32.totalorder %s28, %s31
      %p40 = scmp.eq.s32.totalorder %s23, 1
      %p41 = por %p39, %p40
      %p42 = scmp.ne.s32.totalorder %s31, %s32
      %p43 = scmp.eq.s32.totalorder %s23, 0
      %p44 = por %p42, %p43
      %p45 = scmp.ne.s32.totalorder %s31, %s32
      %p46 = scmp.eq.s32.totalorder %s24, 1
      %p47 = por %p45, %p46
      %p49 = scmp.ne.s32.totalorder %s32, %s48
      %p50 = scmp.eq.s32.totalorder %s24, 0
      %p51 = por %p49, %p50
      %s52 = ssub.s32 %s18, %s25
      %p53 = scmp.eq.s32.totalorder %s52, 0
      %s55 = sadd.s32 %s54, 1
      %s56 = scalar_select %p53, %s54, %s55
      %p59 = pneg %p53
      %p60 = scmp.eq.s32.totalorder %s18, 1
      %p61 = por %p59, %p60
      %p62 = scmp.ne.s32.totalorder %s54, %s57
      %p63 = scmp.eq.s32.totalorder %s18, 0
      %p64 = por %p62, %p63
      %p65 = scmp.ne.s32.totalorder %s54, %s57
      %p66 = scmp.eq.s32.totalorder %s23, 1
      %p67 = por %p65, %p66
      %p68 = scmp.ne.s32.totalorder %s57, %s58
      %p69 = scmp.eq.s32.totalorder %s23, 0
      %p70 = por %p68, %p69
      %p71 = scmp.ne.s32.totalorder %s57, %s58
      %p72 = scmp.eq.s32.totalorder %s24, 1
      %p73 = por %p71, %p72
      %p75 = scmp.ne.s32.totalorder %s58, %s74
      %p76 = scmp.eq.s32.totalorder %s24, 0
      %p77 = por %p75, %p76
      %s78 = ssub.s32 %s18, %s25
      %p79 = scmp.eq.s32.totalorder %s78, 0
      %s81 = sadd.s32 %s80, 1
      %s82 = scalar_select %p79, %s80, %s81
      %p85 = pneg %p79
      %p86 = scmp.eq.s32.totalorder %s18, 1
      %p87 = por %p85, %p86
      %p88 = scmp.ne.s32.totalorder %s80, %s83
      %p89 = scmp.eq.s32.totalorder %s18, 0
      %p90 = por %p88, %p89
      %p91 = scmp.ne.s32.totalorder %s80, %s83
      %p92 = scmp.eq.s32.totalorder %s23, 1
      %p93 = por %p91, %p92
      %p94 = scmp.ne.s32.totalorder %s83, %s84
      %p95 = scmp.eq.s32.totalorder %s23, 0
      %p96 = por %p94, %p95
      %p97 = scmp.ne.s32.totalorder %s83, %s84
      %p98 = scmp.eq.s32.totalorder %s24, 1
      %p99 = por %p97, %p98
      %p101 = scmp.ne.s32.totalorder %s84, %s100
      %p102 = scmp.eq.s32.totalorder %s24, 0
      %p103 = por %p101, %p102
      %s105 = sadd.s32 %s104, 1
      %p108 = scmp.eq.s32.totalorder %s18, 1
      %p109 = scmp.ne.s32.totalorder %s104, %s106
      %p110 = scmp.eq.s32.totalorder %s18, 0
      %p111 = por %p109, %p110
      %p112 = scmp.ne.s32.totalorder %s104, %s106
      %p113 = scmp.eq.s32.totalorder %s23, 1
      %p114 = por %p112, %p113
      %p115 = scmp.ne.s32.totalorder %s106, %s107
      %p116 = scmp.eq.s32.totalorder %s23, 0
      %p117 = por %p115, %p116
      %p118 = scmp.ne.s32.totalorder %s106, %s107
      %p119 = scmp.eq.s32.totalorder %s24, 1
      %p120 = por %p118, %p119
      %p122 = scmp.ne.s32.totalorder %s107, %s121
      %p123 = scmp.eq.s32.totalorder %s24, 0
      %p124 = por %p122, %p123
      %s125 = ssub.s32 %s18, %s25
      %p126 = scmp.eq.s32.totalorder %s125, 0
      %s128 = sadd.s32 %s127, 1
      %s129 = scalar_select %p126, %s127, %s128
      %p132 = pneg %p126
      %p133 = scmp.eq.s32.totalorder %s18, 1
      %p134 = por %p132, %p133
      %p135 = scmp.ne.s32.totalorder %s127, %s130
      %p136 = scmp.eq.s32.totalorder %s18, 0
      %p137 = por %p135, %p136
      %p138 = scmp.ne.s32.totalorder %s127, %s130
      %p139 = scmp.eq.s32.totalorder %s23, 1
      %p140 = por %p138, %p139
      %p141 = scmp.ne.s32.totalorder %s130, %s131
      %p142 = scmp.eq.s32.totalorder %s23, 0
      %p143 = por %p141, %p142
      %p144 = scmp.ne.s32.totalorder %s130, %s131
      %p145 = scmp.eq.s32.totalorder %s24, 1
      %p146 = por %p144, %p145
      %p148 = scmp.ne.s32.totalorder %s131, %s147
      %p149 = scmp.eq.s32.totalorder %s24, 0
      %p150 = por %p148, %p149
      %s151 = ssub.s32 %s18, %s25
      %p152 = scmp.eq.s32.totalorder %s151, 0
      %s154 = sadd.s32 %s153, 1
      %s155 = scalar_select %p152, %s153, %s154
      %p158 = pneg %p152
      %p159 = scmp.eq.s32.totalorder %s18, 1
      %p160 = por %p158, %p159
      %p161 = scmp.ne.s32.totalorder %s153, %s156
      %p162 = scmp.eq.s32.totalorder %s18, 0
      %p163 = por %p161, %p162
      %p164 = scmp.ne.s32.totalorder %s153, %s156
      %p165 = scmp.eq.s32.totalorder %s23, 1
      %p166 = por %p164, %p165
      %p167 = scmp.ne.s32.totalorder %s156, %s157
      %p168 = scmp.eq.s32.totalorder %s23, 0
      %p169 = por %p167, %p168
      %p170 = scmp.ne.s32.totalorder %s156, %s157
      %p171 = scmp.eq.s32.totalorder %s24, 1
      %p172 = por %p170, %p171
      %p174 = scmp.ne.s32.totalorder %s157, %s173
      %p175 = scmp.eq.s32.totalorder %s24, 0
      %p176 = por %p174, %p175
      %p177 = scmp.le.s32.totalorder 1, %s18
      %p178 = scmp.lt.s32.totalorder %s18, 3
      %p179 = pnand %p177, %p178
      %p180 = pneg %p179
      // Predicated region
      $region9: #{tpu_custom_call.1} parent=5 // pred_check
        _
      $region10: #{tpu_custom_call.1} parent=5 // pred_check_branch
        %182 = sbr.rel (%p179) target = $region12
      $region11: #{tpu_custom_call.1} parent=5 // pred_region
        %s183 = ssub.s32 %s18, 1
        // Predicated region
        $region13: #{tpu_custom_call.1} parent=11 // pred_check
          %p184 = pneg %p117
        $region14: #{tpu_custom_call.1} parent=11 // pred_check_branch
          %186 = sbr.rel (%p184) target = $region16
        $region15: #{tpu_custom_call.1} parent=11 // pred_region
          _
        $region16: #{tpu_custom_call.1} parent=11 // pred_fallthru
          _
      $region12: #{tpu_custom_call.1} parent=5 // pred_fallthru
        _
      %p187 = scmp.lt.s32.totalorder %s18, 2
      // Predicated region
      $region17: #{tpu_custom_call.1} parent=5 // pred_check
        %p188 = pneg %p187
      $region18: #{tpu_custom_call.1} parent=5 // pred_check_branch
        %190 = sbr.rel (%p188) target = $region20
      $region19: #{tpu_custom_call.1} parent=5 // pred_region
        // Predicated region
        $region21: #{tpu_custom_call.1} parent=19 // pred_check
          %p191 = pneg %p38
        $region22: #{tpu_custom_call.1} parent=19 // pred_check_branch
          %193 = sbr.rel (%p191) target = $region24
        $region23: #{tpu_custom_call.1} parent=19 // pred_region
          %s194 = sand.u32 %s28, 1
          %s195 = sand.u32 %s28, 1
          %s196 = smul.addr %s195, 16
          %s197 = scalar_lea.vmem [#allocation2], %s196
          %s198 = smul.addr %s18, 8
          %s199 = scalar_lea.vmem %s0, %s198
          // Predicated region
          $region25: #{tpu_custom_call.1} parent=23 // pred_check
            _
          $region26: #{tpu_custom_call.1} parent=23 // pred_check_branch
            %201 = sbr.rel (0) target = $region28
          $region27: #{tpu_custom_call.1} parent=23 // pred_region
            // Predicated region
            $region29: #{tpu_custom_call.1} parent=27 // pred_check
              _
            $region30: #{tpu_custom_call.1} parent=27 // pred_check_branch
              %203 = sbr.rel (0) target = $region32
            $region31: #{tpu_custom_call.1} parent=27 // pred_region
              // Predicated region
              $region44: #{tpu_custom_call.1} parent=31 // pred_check
                _
              $region45: #{tpu_custom_call.1} parent=31 // pred_check_branch
                %220 = sbr.rel (0) target = $region47
              $region46: #{tpu_custom_call.1} parent=31 // pred_region
                loop: start=0, step=1, limit=1
                $region48: #{tpu_custom_call.1} parent=46 // loop_pre_header
                  _
                $region49: #{tpu_custom_call.1} parent=46 // loop_header
                  %s222 = sphi 0, %s226
                  %p223 = scmp.ge.s32.totalorder %s222, 1
                  %s227 = sphi %s199, %s199
                  %s228 = sphi %s197, %s197
                $region50: #{tpu_custom_call.1} parent=46 // loop_header_branch
                  %225 = sbr.rel (%p223) target = $region54
                $region51: #{tpu_custom_call.1} parent=46 // loop_body
                  %v229 = vld [vmem:[%s227] sm:$0xff]
                  %230 = vst [vmem:[%s228] sm:$0xff] %v229
                  %v231 = vld [vmem:[%s227 + $0x10] sm:$0xff]
                  %232 = vst [vmem:[%s228 + $0x8] sm:$0xff] %v231
                $region52: #{tpu_custom_call.1} parent=46 // loop_footer
                  %s226 = sadd.s32 1, %s222
                $region53: #{tpu_custom_call.1} parent=46 // loop_footer_branch
                  %221 = sbr.rel target = $region49
                $region54: #{tpu_custom_call.1} parent=46 // loop_exit
                  _
              $region47: #{tpu_custom_call.1} parent=31 // pred_fallthru
                _
              // Predicated region
              $region55: #{tpu_custom_call.1} parent=31 // pred_check
                _
              $region56: #{tpu_custom_call.1} parent=31 // pred_check_branch
                %234 = sbr.rel target = $region58
              $region57: #{tpu_custom_call.1} parent=31 // pred_region
                _
              $region58: #{tpu_custom_call.1} parent=31 // pred_fallthru
                _
            $region32: #{tpu_custom_call.1} parent=27 // pred_fallthru
              _
            // Predicated region
            $region33: #{tpu_custom_call.1} parent=27 // pred_check
              _
            $region34: #{tpu_custom_call.1} parent=27 // pred_check_branch
              %205 = sbr.rel target = $region36
            $region35: #{tpu_custom_call.1} parent=27 // pred_region
              loop: start=0, step=1, limit=1
              $region37: #{tpu_custom_call.1} parent=35 // loop_pre_header
                _
              $region38: #{tpu_custom_call.1} parent=35 // loop_header
                %s208 = sphi 0, %s212
                %p209 = scmp.ge.s32.totalorder %s208, 1
                %s213 = sphi %s199, %s199
                %s214 = sphi %s197, %s197
              $region39: #{tpu_custom_call.1} parent=35 // loop_header_branch
                %211 = sbr.rel (%p209) target = $region43
              $region40: #{tpu_custom_call.1} parent=35 // loop_body
                %v215 = vld [vmem:[%s213] sm:$0xff]
                %216 = vst [vmem:[%s214] sm:$0xff] %v215
                %v217 = vld [vmem:[%s213 + $0x10] sm:$0xff]
                %218 = vst [vmem:[%s214 + $0x8] sm:$0xff] %v217
              $region41: #{tpu_custom_call.1} parent=35 // loop_footer
                %s212 = sadd.s32 1, %s208
              $region42: #{tpu_custom_call.1} parent=35 // loop_footer_branch
                %207 = sbr.rel target = $region38
              $region43: #{tpu_custom_call.1} parent=35 // loop_exit
                _
            $region36: #{tpu_custom_call.1} parent=27 // pred_fallthru
              _
          $region28: #{tpu_custom_call.1} parent=23 // pred_fallthru
            _
          %235 = vnop
        $region24: #{tpu_custom_call.1} parent=19 // pred_fallthru
          _
        // Predicated region
        $region59: #{tpu_custom_call.1} parent=19 // pred_check
          %p236 = pneg %p64
        $region60: #{tpu_custom_call.1} parent=19 // pred_check_branch
          %238 = sbr.rel (%p236) target = $region62
        $region61: #{tpu_custom_call.1} parent=19 // pred_region
          %s239 = sand.u32 %s54, 1
          %s240 = sand.u32 %s54, 1
          %s241 = smul.addr %s240, 32
          %s242 = scalar_lea.vmem [#allocation3], %s241
          %s243 = smul.addr %s18, 8
          %s244 = scalar_lea.vmem %s1, %s243
          // Predicated region
          $region63: #{tpu_custom_call.1} parent=61 // pred_check
            _
          $region64: #{tpu_custom_call.1} parent=61 // pred_check_branch
            %246 = sbr.rel (0) target = $region66
          $region65: #{tpu_custom_call.1} parent=61 // pred_region
            // Predicated region
            $region67: #{tpu_custom_call.1} parent=65 // pred_check
              _
            $region68: #{tpu_custom_call.1} parent=65 // pred_check_branch
              %248 = sbr.rel (0) target = $region70
            $region69: #{tpu_custom_call.1} parent=65 // pred_region
              // Predicated region
              $region82: #{tpu_custom_call.1} parent=69 // pred_check
                _
              $region83: #{tpu_custom_call.1} parent=69 // pred_check_branch
                %269 = sbr.rel (0) target = $region85
              $region84: #{tpu_custom_call.1} parent=69 // pred_region
                loop: start=0, step=1, limit=1
                $region86: #{tpu_custom_call.1} parent=84 // loop_pre_header
                  _
                $region87: #{tpu_custom_call.1} parent=84 // loop_header
                  %s271 = sphi 0, %s275
                  %p272 = scmp.ge.s32.totalorder %s271, 1
                  %s276 = sphi %s244, %s244
                  %s277 = sphi %s242, %s242
                $region88: #{tpu_custom_call.1} parent=84 // loop_header_branch
                  %274 = sbr.rel (%p272) target = $region92
                $region89: #{tpu_custom_call.1} parent=84 // loop_body
                  %v278 = vld [vmem:[%s276] sm:$0xff]
                  %279 = vst [vmem:[%s277] sm:$0xff] %v278
                  %v280 = vld [vmem:[%s276 + $0x10] sm:$0xff]
                  %281 = vst [vmem:[%s277 + $0x8] sm:$0xff] %v280
                  %v282 = vld [vmem:[%s276 + $0x20] sm:$0xff]
                  %283 = vst [vmem:[%s277 + $0x10] sm:$0xff] %v282
                  %v284 = vld [vmem:[%s276 + $0x30] sm:$0xff]
                  %285 = vst [vmem:[%s277 + $0x18] sm:$0xff] %v284
                $region90: #{tpu_custom_call.1} parent=84 // loop_footer
                  %s275 = sadd.s32 1, %s271
                $region91: #{tpu_custom_call.1} parent=84 // loop_footer_branch
                  %270 = sbr.rel target = $region87
                $region92: #{tpu_custom_call.1} parent=84 // loop_exit
                  _
              $region85: #{tpu_custom_call.1} parent=69 // pred_fallthru
                _
              // Predicated region
              $region93: #{tpu_custom_call.1} parent=69 // pred_check
                _
              $region94: #{tpu_custom_call.1} parent=69 // pred_check_branch
                %287 = sbr.rel target = $region96
              $region95: #{tpu_custom_call.1} parent=69 // pred_region
                _
              $region96: #{tpu_custom_call.1} parent=69 // pred_fallthru
                _
            $region70: #{tpu_custom_call.1} parent=65 // pred_fallthru
              _
            // Predicated region
            $region71: #{tpu_custom_call.1} parent=65 // pred_check
              _
            $region72: #{tpu_custom_call.1} parent=65 // pred_check_branch
              %250 = sbr.rel target = $region74
            $region73: #{tpu_custom_call.1} parent=65 // pred_region
              loop: start=0, step=1, limit=1
              $region75: #{tpu_custom_call.1} parent=73 // loop_pre_header
                _
              $region76: #{tpu_custom_call.1} parent=73 // loop_header
                %s253 = sphi 0, %s257
                %p254 = scmp.ge.s32.totalorder %s253, 1
                %s258 = sphi %s244, %s244
                %s259 = sphi %s242, %s242
              $region77: #{tpu_custom_call.1} parent=73 // loop_header_branch
                %256 = sbr.rel (%p254) target = $region81
              $region78: #{tpu_custom_call.1} parent=73 // loop_body
                %v260 = vld [vmem:[%s258] sm:$0xff]
                %261 = vst [vmem:[%s259] sm:$0xff] %v260
                %v262 = vld [vmem:[%s258 + $0x10] sm:$0xff]
                %263 = vst [vmem:[%s259 + $0x8] sm:$0xff] %v262
                %v264 = vld [vmem:[%s258 + $0x20] sm:$0xff]
                %265 = vst [vmem:[%s259 + $0x10] sm:$0xff] %v264
                %v266 = vld [vmem:[%s258 + $0x30] sm:$0xff]
                %267 = vst [vmem:[%s259 + $0x18] sm:$0xff] %v266
              $region79: #{tpu_custom_call.1} parent=73 // loop_footer
                %s257 = sadd.s32 1, %s253
              $region80: #{tpu_custom_call.1} parent=73 // loop_footer_branch
                %252 = sbr.rel target = $region76
              $region81: #{tpu_custom_call.1} parent=73 // loop_exit
                _
            $region74: #{tpu_custom_call.1} parent=65 // pred_fallthru
              _
          $region66: #{tpu_custom_call.1} parent=61 // pred_fallthru
            _
          %288 = vnop
        $region62: #{tpu_custom_call.1} parent=19 // pred_fallthru
          _
        // Predicated region
        $region97: #{tpu_custom_call.1} parent=19 // pred_check
          %p289 = pneg %p90
        $region98: #{tpu_custom_call.1} parent=19 // pred_check_branch
          %291 = sbr.rel (%p289) target = $region100
        $region99: #{tpu_custom_call.1} parent=19 // pred_region
          %p292 = scmp.lt.s32.totalorder %s18, 1
          %s293 = scalar_select %p292, %s18, 1
          %s294 = scalar_lea.vmem %s2, %s293
        $region100: #{tpu_custom_call.1} parent=19 // pred_fallthru
          _
      $region20: #{tpu_custom_call.1} parent=5 // pred_fallthru
        _
      %p295 = scmp.le.s32.totalorder 1, %s18
      %p296 = scmp.lt.s32.totalorder %s18, 3
      %p297 = pnand %p295, %p296
      %p298 = pneg %p297
      // Predicated region
      $region101: #{tpu_custom_call.1} parent=5 // pred_check
        _
      $region102: #{tpu_custom_call.1} parent=5 // pred_check_branch
        %300 = sbr.rel (%p297) target = $region104
      $region103: #{tpu_custom_call.1} parent=5 // pred_region
        %s301 = ssub.s32 %s18, 1
        %s302 = sand.u32 %s31, 1
        %s303 = sand.u32 %s31, 1
        %s304 = smul.addr %s303, 16
        %s305 = scalar_lea.vmem [#allocation2], %s304
        // Predicated region
        $region105: #{tpu_custom_call.1} parent=103 // pred_check
          %p306 = pneg %p44
        $region106: #{tpu_custom_call.1} parent=103 // pred_check_branch
          %308 = sbr.rel (%p306) target = $region108
        $region107: #{tpu_custom_call.1} parent=103 // pred_region
          _
        $region108: #{tpu_custom_call.1} parent=103 // pred_fallthru
          _
        %s309 = sand.u32 %s57, 1
        %s310 = sand.u32 %s57, 1
        %s311 = smul.addr %s310, 32
        %s312 = scalar_lea.vmem [#allocation3], %s311
        // Predicated region
        $region109: #{tpu_custom_call.1} parent=103 // pred_check
          %p313 = pneg %p70
        $region110: #{tpu_custom_call.1} parent=103 // pred_check_branch
          %315 = sbr.rel (%p313) target = $region112
        $region111: #{tpu_custom_call.1} parent=103 // pred_region
          _
        $region112: #{tpu_custom_call.1} parent=103 // pred_fallthru
          _
        %s316 = sand.u32 %s31, 1
        %s317 = sand.u32 %s31, 1
        %s318 = smul.addr %s317, 16
        %s319 = scalar_lea.vmem [#allocation2], %s318
        %p320 = pneg %p44
        %p321 = pneg %p41
        %s322 = sand.u32 %s57, 1
        %s323 = sand.u32 %s57, 1
        %s324 = smul.addr %s323, 32
        %s325 = scalar_lea.vmem [#allocation3], %s324
        %p326 = pneg %p70
        %p327 = pneg %p67
        %p328 = scmp.lt.s32.totalorder %s23, 1
        %s329 = scalar_select %p328, %s23, 1
        %s330 = scalar_lea.vmem %s2, %s329
        %p331 = pneg %p96
        %p332 = pneg %p93
        %p333 = pneg %p117
        %p334 = pneg %p114
        %p335 = pneg %p143
        %p336 = pneg %p140
        %s337 = sand.u32 %s130, 1
        %s338 = scalar_lea.sflag [#allocation5], %s337
        %s339 = sand.u32 %s130, 1
        %s340 = scalar_lea.vmem [#allocation4], %s339
        %p341 = pneg %p169
        %p342 = pneg %p166
        %s343 = sand.u32 %s156, 1
        %s344 = scalar_lea.sflag [#allocation7], %s343
        %s345 = sand.u32 %s156, 1
        %s346 = scalar_lea.vmem [#allocation6], %s345
        %p347 = scmp.lt.s32.totalorder %s23, 1
        %s348 = scalar_select %p347, %s23, 1
        %s349 = scalar_lea.vmem %s2, %s348
        %v350 = vld [vmem:[%s305] sm:$0xff]
        %v351 = vld [vmem:[%s305 + $0x8] sm:$0xff]
        %v352 = vmax.f32 %v350, %v351
        %v353 = vrot.slane %v352, 4
        %v354 = vmax.f32 %v352, %v353
        %v355 = vrot.slane %v354, 2
        %v356 = vmax.f32 %v354, %v355
        %v357 = vrot.slane %v356, 1
        %v358 = vmax.f32 %v356, %v357
        %v359 = vlaneseq
        %v360 = vshrl.u32 %v359, 7
        %v361 = vadd.s32 %v360, 8
        %vm362 = vcmp.eq.f32.partialorder %v350, %v358
        %vm363 = vcmp.eq.f32.partialorder %v351, %v358
        %v364 = vsel %vm362, %v360, 16
        %v365 = vsel %vm363, %v361, 16
        %vm366 = vcmp.lt.s32.totalorder %v364, %v365
        %v367 = vsel %vm366, %v364, %v365
        %v368 = vrot.slane %v367, 4
        %vm369 = vcmp.lt.s32.totalorder %v367, %v368
        %v370 = vsel %vm369, %v367, %v368
        %v371 = vrot.slane %v370, 2
        %vm372 = vcmp.lt.s32.totalorder %v370, %v371
        %v373 = vsel %vm372, %v370, %v371
        %v374 = vrot.slane %v373, 1
        %vm375 = vcmp.lt.s32.totalorder %v373, %v374
        %v376 = vsel %vm375, %v373, %v374
        %vm377 = vcmp.eq.s32.totalorder %v360, %v376
        %vm378 = vcmp.eq.s32.totalorder %v361, %v376
        %v379 = vsel %vm377, 1, 0
        %v380 = vsel %vm378, 1, 0
        %v381 = vcvt.s32.f32 %v379
        %v382 = vcvt.s32.f32 %v380
        %v383 = vld [vmem:[%s312] sm:$0xff]
        %v384 = vld [vmem:[%s312 + $0x8] sm:$0xff]
        %v385 = vld [vmem:[%s312 + $0x10] sm:$0xff]
        %v386 = vld [vmem:[%s312 + $0x18] sm:$0xff]
        %v387 = vld [vmem:[%s3] sm:$0xff]
        %v388 = vld [vmem:[%s3 + $0x8] sm:$0xff]
        %v389 = vld [vmem:[%s3 + $0x10] sm:$0xff]
        %v390 = vld [vmem:[%s3 + $0x18] sm:$0xff]
        %v391 = vld [vmem:[%s3 + $0x20] sm:$0xff]
        %v392 = vld [vmem:[%s3 + $0x28] sm:$0xff]
        %v393 = vld [vmem:[%s3 + $0x30] sm:$0xff]
        %v394 = vld [vmem:[%s3 + $0x38] sm:$0xff]
        %v395 = vld [vmem:[%s3 + $0x40] sm:$0xff]
        %v396 = vld [vmem:[%s3 + $0x48] sm:$0xff]
        %v397 = vld [vmem:[%s3 + $0x50] sm:$0xff]
        %v398 = vld [vmem:[%s3 + $0x58] sm:$0xff]
        %v399 = vld [vmem:[%s3 + $0x60] sm:$0xff]
        %v400 = vld [vmem:[%s3 + $0x68] sm:$0xff]
        %v401 = vld [vmem:[%s3 + $0x70] sm:$0xff]
        %v402 = vld [vmem:[%s3 + $0x78] sm:$0xff]
        %vm403 = vcmask 392192
        %v405 = vsel %vm403, %v387, 0
        %v408 = vsel %vm403, %v388, 0
        %v411 = vsel %vm403, %v389, 0
        %v414 = vsel %vm403, %v390, 0
        %v417 = vsel %vm403, %v391, 0
        %v420 = vsel %vm403, %v392, 0
        %v423 = vsel %vm403, %v393, 0
        %v426 = vsel %vm403, %v394, 0
        %v429 = vsel %vm403, %v395, 0
        %v432 = vsel %vm403, %v396, 0
        %v435 = vsel %vm403, %v397, 0
        %v438 = vsel %vm403, %v398, 0
        %v441 = vsel %vm403, %v399, 0
        %v444 = vsel %vm403, %v400, 0
        %v447 = vsel %vm403, %v401, 0
        %v450 = vsel %vm403, %v402, 0
        %452 = vmatprep.subr.mxu0 0.0
        %453 = vmatpush1.msra.mxu0 %v383
        %454 = vmatprep.subr.mxu0 0.0
        %455 = vmatpush1.msra.mxu0 %v384
        %456 = vmatprep.subr.mxu0 0.0
        %457 = vmatpush1.msra.mxu0 %v385
        %458 = vmatprep.subr.mxu0 0.0
        %459 = vmatpush1.msra.mxu0 %v386
        %460 = vmatprep.subr.mxu0 0.0
        %461 = vmatpush1.msra.mxu0 %v381
        %462 = vmatprep.subr.mxu0 0.0
        %463 = vmatpush1.msra.mxu0 %v382
        %464 = vmatprep.subr.mxu0 0.0
        %465 = vmatpush1.msra.mxu0 0.0
        %466 = vmatprep.subr.mxu0 0.0
        %467 = vmatpush1.msra.mxu0 0.0
        %468 = vmatprep.subr.mxu0 0.0
        %469 = vmatpush1.msra.mxu0 0.0
        %470 = vmatprep.subr.mxu0 0.0
        %471 = vmatpush1.msra.mxu0 0.0
        %472 = vmatprep.subr.mxu0 0.0
        %473 = vmatpush1.msra.mxu0 0.0
        %474 = vmatprep.subr.mxu0 0.0
        %475 = vmatpush1.msra.mxu0 0.0
        %476 = vmatprep.subr.mxu0 0.0
        %477 = vmatpush1.msra.mxu0 0.0
        %478 = vmatprep.subr.mxu0 0.0
        %479 = vmatpush1.msra.mxu0 0.0
        %480 = vmatprep.subr.mxu0 0.0
        %481 = vmatpush1.msra.mxu0 0.0
        %482 = vmatprep.subr.mxu0 0.0
        %483 = vmatpush1.msra.mxu0 0.0
        %484 = vmatprep.subr.mxu0 0.0
        %485 = vmatpush1.msra.mxu0 0.0
        %486 = vmatprep.subr.mxu0 0.0
        %487 = vmatpush1.msra.mxu0 0.0
        %488 = vmatprep.subr.mxu0 0.0
        %489 = vmatpush1.msra.mxu0 0.0
        %490 = vmatprep.subr.mxu0 0.0
        %491 = vmatpush1.msra.mxu0 0.0
        %492 = vmatprep.subr.mxu0 0.0
        %493 = vmatpush1.msra.mxu0 0.0
        %494 = vmatprep.subr.mxu0 0.0
        %495 = vmatpush1.msra.mxu0 0.0
        %496 = vmatprep.subr.mxu0 0.0
        %497 = vmatpush1.msra.mxu0 0.0
        %498 = vmatprep.subr.mxu0 0.0
        %499 = vmatpush1.msra.mxu0 0.0
        %500 = vmatprep.subr.mxu0 0.0
        %501 = vmatpush1.msra.mxu0 0.0
        %502 = vmatprep.subr.mxu0 0.0
        %503 = vmatpush1.msra.mxu0 0.0
        %504 = vmatprep.subr.mxu0 0.0
        %505 = vmatpush1.msra.mxu0 0.0
        %506 = vmatprep.subr.mxu0 0.0
        %507 = vmatpush1.msra.mxu0 0.0
        %508 = vmatprep.subr.mxu0 0.0
        %509 = vmatpush1.msra.mxu0 0.0
        %510 = vmatprep.subr.mxu0 0.0
        %511 = vmatpush1.msra.mxu0 0.0
        %512 = vmatprep.subr.mxu0 0.0
        %513 = vmatpush1.msra.mxu0 0.0
        %514 = vmatprep.subr.mxu0 0.0
        %515 = vmatpush1.msra.mxu0 0.0
        %516 = vmatprep.mubr.f32.mxu0 0.0
        %517 = vmatmul.mubr.f32.gmra.mrb[0].mxu0 %v405
        %v518 = vpop.f32.mrb[0].mxu0
        %v519 = vadd.f32 0.0, %v518
        %v520 = vpop.f32.mrb[0].mxu0
        %521 = vmatprep.mubr.f32.mxu0 0.0
        %522 = vmatmul.mubr.f32.gmra.mrb[0].mxu0 %v408
        %v523 = vpop.f32.mrb[0].mxu0
        %v524 = vadd.f32 0.0, %v523
        %v525 = vpop.f32.mrb[0].mxu0
        %526 = vmatprep.mubr.f32.mxu0 0.0
        %527 = vmatmul.mubr.f32.gmra.mrb[0].mxu0 %v411
        %v528 = vpop.f32.mrb[0].mxu0
        %v529 = vadd.f32 0.0, %v528
        %v530 = vpop.f32.mrb[0].mxu0
        %531 = vmatprep.mubr.f32.mxu0 0.0
        %532 = vmatmul.mubr.f32.gmra.mrb[0].mxu0 %v414
        %v533 = vpop.f32.mrb[0].mxu0
        %v534 = vadd.f32 0.0, %v533
        %v535 = vpop.f32.mrb[0].mxu0
        %536 = vmatprep.mubr.f32.mxu0 0.0
        %537 = vmatmul.mubr.f32.gmra.mrb[0].mxu0 %v417
        %v538 = vpop.f32.mrb[0].mxu0
        %v539 = vadd.f32 0.0, %v538
        %v540 = vpop.f32.mrb[0].mxu0
        %541 = vmatprep.mubr.f32.mxu0 0.0
        %542 = vmatmul.mubr.f32.gmra.mrb[0].mxu0 %v420
        %v543 = vpop.f32.mrb[0].mxu0
        %v544 = vadd.f32 0.0, %v543
        %v545 = vpop.f32.mrb[0].mxu0
        %546 = vmatprep.mubr.f32.mxu0 0.0
        %547 = vmatmul.mubr.f32.gmra.mrb[0].mxu0 %v423
        %v548 = vpop.f32.mrb[0].mxu0
        %v549 = vadd.f32 0.0, %v548
        %v550 = vpop.f32.mrb[0].mxu0
        %551 = vmatprep.mubr.f32.mxu0 0.0
        %552 = vmatmul.mubr.f32.gmra.mrb[0].mxu0 %v426
        %v553 = vpop.f32.mrb[0].mxu0
        %v554 = vadd.f32 0.0, %v553
        %v555 = vpop.f32.mrb[0].mxu0
        %556 = vmatprep.mubr.f32.mxu0 0.0
        %557 = vmatmul.mubr.f32.gmra.mrb[0].mxu0 %v429
        %v558 = vpop.f32.mrb[0].mxu0
        %v559 = vadd.f32 0.0, %v558
        %v560 = vpop.f32.mrb[0].mxu0
        %561 = vmatprep.mubr.f32.mxu0 0.0
        %562 = vmatmul.mubr.f32.gmra.mrb[0].mxu0 %v432
        %v563 = vpop.f32.mrb[0].mxu0
        %v564 = vadd.f32 0.0, %v563
        %v565 = vpop.f32.mrb[0].mxu0
        %566 = vmatprep.mubr.f32.mxu0 0.0
        %567 = vmatmul.mubr.f32.gmra.mrb[0].mxu0 %v435
        %v568 = vpop.f32.mrb[0].mxu0
        %v569 = vadd.f32 0.0, %v568
        %v570 = vpop.f32.mrb[0].mxu0
        %571 = vmatprep.mubr.f32.mxu0 0.0
        %572 = vmatmul.mubr.f32.gmra.mrb[0].mxu0 %v438
        %v573 = vpop.f32.mrb[0].mxu0
        %v574 = vadd.f32 0.0, %v573
        %v575 = vpop.f32.mrb[0].mxu0
        %576 = vmatprep.mubr.f32.mxu0 0.0
        %577 = vmatmul.mubr.f32.gmra.mrb[0].mxu0 %v441
        %v578 = vpop.f32.mrb[0].mxu0
        %v579 = vadd.f32 0.0, %v578
        %v580 = vpop.f32.mrb[0].mxu0
        %581 = vmatprep.mubr.f32.mxu0 0.0
        %582 = vmatmul.mubr.f32.gmra.mrb[0].mxu0 %v444
        %v583 = vpop.f32.mrb[0].mxu0
        %v584 = vadd.f32 0.0, %v583
        %v585 = vpop.f32.mrb[0].mxu0
        %586 = vmatprep.mubr.f32.mxu0 0.0
        %587 = vmatmul.mubr.f32.gmra.mrb[0].mxu0 %v447
        %v588 = vpop.f32.mrb[0].mxu0
        %v589 = vadd.f32 0.0, %v588
        %v590 = vpop.f32.mrb[0].mxu0
        %591 = vmatprep.mubr.f32.mxu0 0.0
        %592 = vmatmul.mubr.f32.gmra.mrb[0].mxu0 %v450
        %v593 = vpop.f32.mrb[0].mxu0
        %v594 = vadd.f32 0.0, %v593
        %v595 = vpop.f32.mrb[0].mxu0
        %596 = vdwg.mxu0
        %v597 = vadd.s32 %v360, 16
        %v598 = vadd.s32 %v360, 24
        %v599 = vadd.s32 %v360, 32
        %v600 = vadd.s32 %v360, 40
        %v601 = vadd.s32 %v360, 48
        %v602 = vadd.s32 %v360, 56
        %v603 = vadd.s32 %v360, 64
        %v604 = vadd.s32 %v360, 72
        %v605 = vadd.s32 %v360, 80
        %v606 = vadd.s32 %v360, 88
        %v607 = vadd.s32 %v360, 96
        %v608 = vadd.s32 %v360, 104
        %v609 = vadd.s32 %v360, 112
        %v610 = vadd.s32 %v360, 120
        %vm611 = vcmp.lt.s32.totalorder %v360, 8
        %vm612 = vcmp.lt.s32.totalorder %v361, 8
        %vm613 = vcmp.lt.s32.totalorder %v597, 8
        %vm614 = vcmp.lt.s32.totalorder %v598, 8
        %vm615 = vcmp.lt.s32.totalorder %v599, 8
        %vm616 = vcmp.lt.s32.totalorder %v600, 8
        %vm617 = vcmp.lt.s32.totalorder %v601, 8
        %vm618 = vcmp.lt.s32.totalorder %v602, 8
        %vm619 = vcmp.lt.s32.totalorder %v603, 8
        %vm620 = vcmp.lt.s32.totalorder %v604, 8
        %vm621 = vcmp.lt.s32.totalorder %v605, 8
        %vm622 = vcmp.lt.s32.totalorder %v606, 8
        %vm623 = vcmp.lt.s32.totalorder %v607, 8
        %vm624 = vcmp.lt.s32.totalorder %v608, 8
        %vm625 = vcmp.lt.s32.totalorder %v609, 8
        %vm626 = vcmp.lt.s32.totalorder %v610, 8
        %v627 = vsel %vm611, %v519, -1e+30
        %v628 = vsel %vm612, %v524, -1e+30
        %v629 = vsel %vm613, %v529, -1e+30
        %v630 = vsel %vm614, %v534, -1e+30
        %v631 = vsel %vm615, %v539, -1e+30
        %v632 = vsel %vm616, %v544, -1e+30
        %v633 = vsel %vm617, %v549, -1e+30
        %v634 = vsel %vm618, %v554, -1e+30
        %v635 = vsel %vm619, %v559, -1e+30
        %v636 = vsel %vm620, %v564, -1e+30
        %v637 = vsel %vm621, %v569, -1e+30
        %v638 = vsel %vm622, %v574, -1e+30
        %v639 = vsel %vm623, %v579, -1e+30
        %v640 = vsel %vm624, %v584, -1e+30
        %v641 = vsel %vm625, %v589, -1e+30
        %v642 = vsel %vm626, %v594, -1e+30
        %v643 = vmax.f32 %v627, %v631
        %v644 = vmax.f32 %v628, %v632
        %v645 = vmax.f32 %v629, %v633
        %v646 = vmax.f32 %v630, %v634
        %v647 = vmax.f32 %v643, %v635
        %v648 = vmax.f32 %v644, %v636
        %v649 = vmax.f32 %v645, %v637
        %v650 = vmax.f32 %v646, %v638
        %v651 = vmax.f32 %v647, %v639
        %v652 = vmax.f32 %v648, %v640
        %v653 = vmax.f32 %v649, %v641
        %v654 = vmax.f32 %v650, %v642
        %v655 = vmax.f32 %v651, %v652
        %v656 = vmax.f32 %v653, %v654
        %v657 = vmax.f32 %v655, %v656
        %v658 = vrot.slane %v657, 4
        %v659 = vmax.f32 %v657, %v658
        %v660 = vrot.slane %v659, 2
        %v661 = vmax.f32 %v659, %v660
        %v662 = vrot.slane %v661, 1
        %v663 = vmax.f32 %v661, %v662
        %v664 = vsub.f32 %v627, %v663
        %v665 = vsub.f32 %v628, %v663
        %v666 = vsub.f32 %v629, %v663
        %v667 = vsub.f32 %v630, %v663
        %v668 = vsub.f32 %v631, %v663
        %v669 = vsub.f32 %v632, %v663
        %v670 = vsub.f32 %v633, %v663
        %v671 = vsub.f32 %v634, %v663
        %v672 = vsub.f32 %v635, %v663
        %v673 = vsub.f32 %v636, %v663
        %v674 = vsub.f32 %v637, %v663
        %v675 = vsub.f32 %v638, %v663
        %v676 = vsub.f32 %v639, %v663
        %v677 = vsub.f32 %v640, %v663
        %v678 = vsub.f32 %v641, %v663
        %v679 = vsub.f32 %v642, %v663
        %v680 = vmul.f32 %v664, 1.442695
        %v681 = vpow.pop %v680
        %v682 = vmul.f32 %v665, 1.442695
        %v683 = vpow.pop %v682
        %v684 = vmul.f32 %v666, 1.442695
        %v685 = vpow.pop %v684
        %v686 = vmul.f32 %v667, 1.442695
        %v687 = vpow.pop %v686
        %v688 = vmul.f32 %v668, 1.442695
        %v689 = vpow.pop %v688
        %v690 = vmul.f32 %v669, 1.442695
        %v691 = vpow.pop %v690
        %v692 = vmul.f32 %v670, 1.442695
        %v693 = vpow.pop %v692
        %v694 = vmul.f32 %v671, 1.442695
        %v695 = vpow.pop %v694
        %v696 = vmul.f32 %v672, 1.442695
        %v697 = vpow.pop %v696
        %v698 = vmul.f32 %v673, 1.442695
        %v699 = vpow.pop %v698
        %v700 = vmul.f32 %v674, 1.442695
        %v701 = vpow.pop %v700
        %v702 = vmul.f32 %v675, 1.442695
        %v703 = vpow.pop %v702
        %v704 = vmul.f32 %v676, 1.442695
        %v705 = vpow.pop %v704
        %v706 = vmul.f32 %v677, 1.442695
        %v707 = vpow.pop %v706
        %v708 = vmul.f32 %v678, 1.442695
        %v709 = vpow.pop %v708
        %v710 = vmul.f32 %v679, 1.442695
        %v711 = vpow.pop %v710
        %v712 = vadd.f32 %v681, %v683
        %v713 = vadd.f32 %v712, %v685
        %v714 = vadd.f32 %v713, %v687
        %v715 = vadd.f32 %v714, %v689
        %v716 = vadd.f32 %v715, %v691
        %v717 = vadd.f32 %v716, %v693
        %v718 = vadd.f32 %v717, %v695
        %v719 = vadd.f32 %v718, %v697
        %v720 = vadd.f32 %v719, %v699
        %v721 = vadd.f32 %v720, %v701
        %v722 = vadd.f32 %v721, %v703
        %v723 = vadd.f32 %v722, %v705
        %v724 = vadd.f32 %v723, %v707
        %v725 = vadd.f32 %v724, %v709
        %v726 = vadd.f32 %v725, %v711
        %v727 = vrot.slane %v726, 4
        %v728 = vadd.f32 %v726, %v727
        %v729 = vrot.slane %v728, 2
        %v730 = vadd.f32 %v728, %v729
        %v731 = vrot.slane %v730, 1
        %v732 = vadd.f32 %v730, %v731
        %v733 = vlog2.pop %v732
        %v734 = vmul.f32 %v733, 0.6931472
        %v735 = vadd.f32 %v663, %v734
        %v736 = vld [vmem:[%s349] sm:$0x1]
        %v737 = vlaneseq
        %v738 = vshrl.u32 %v737, 7
        %v739 = vsub.s32 0, %v738
        %v740 = vrot.slane %v736, %v739
        %vm741 = vcmp.eq.s32.totalorder %v360, %v740
        %vm742 = vcmp.eq.s32.totalorder %v361, %v740
        %vm743 = vcmp.eq.s32.totalorder %v597, %v740
        %vm744 = vcmp.eq.s32.totalorder %v598, %v740
        %vm745 = vcmp.eq.s32.totalorder %v599, %v740
        %vm746 = vcmp.eq.s32.totalorder %v600, %v740
        %vm747 = vcmp.eq.s32.totalorder %v601, %v740
        %vm748 = vcmp.eq.s32.totalorder %v602, %v740
        %vm749 = vcmp.eq.s32.totalorder %v603, %v740
        %vm750 = vcmp.eq.s32.totalorder %v604, %v740
        %vm751 = vcmp.eq.s32.totalorder %v605, %v740
        %vm752 = vcmp.eq.s32.totalorder %v606, %v740
        %vm753 = vcmp.eq.s32.totalorder %v607, %v740
        %vm754 = vcmp.eq.s32.totalorder %v608, %v740
        %vm755 = vcmp.eq.s32.totalorder %v609, %v740
        %vm756 = vcmp.eq.s32.totalorder %v610, %v740
        %v757 = vsel %vm741, %v627, 0.0
        %v758 = vsel %vm742, %v628, 0.0
        %v759 = vsel %vm743, %v629, 0.0
        %v760 = vsel %vm744, %v630, 0.0
        %v761 = vsel %vm745, %v631, 0.0
        %v762 = vsel %vm746, %v632, 0.0
        %v763 = vsel %vm747, %v633, 0.0
        %v764 = vsel %vm748, %v634, 0.0
        %v765 = vsel %vm749, %v635, 0.0
        %v766 = vsel %vm750, %v636, 0.0
        %v767 = vsel %vm751, %v637, 0.0
        %v768 = vsel %vm752, %v638, 0.0
        %v769 = vsel %vm753, %v639, 0.0
        %v770 = vsel %vm754, %v640, 0.0
        %v771 = vsel %vm755, %v641, 0.0
        %v772 = vsel %vm756, %v642, 0.0
        %v773 = vadd.f32 %v757, %v758
        %v774 = vadd.f32 %v773, %v759
        %v775 = vadd.f32 %v774, %v760
        %v776 = vadd.f32 %v775, %v761
        %v777 = vadd.f32 %v776, %v762
        %v778 = vadd.f32 %v777, %v763
        %v779 = vadd.f32 %v778, %v764
        %v780 = vadd.f32 %v779, %v765
        %v781 = vadd.f32 %v780, %v766
        %v782 = vadd.f32 %v781, %v767
        %v783 = vadd.f32 %v782, %v768
        %v784 = vadd.f32 %v783, %v769
        %v785 = vadd.f32 %v784, %v770
        %v786 = vadd.f32 %v785, %v771
        %v787 = vadd.f32 %v786, %v772
        %v788 = vrot.slane %v787, 4
        %v789 = vadd.f32 %v787, %v788
        %v790 = vrot.slane %v789, 2
        %v791 = vadd.f32 %v789, %v790
        %v792 = vrot.slane %v791, 1
        %v793 = vadd.f32 %v791, %v792
        %v794 = vsub.f32 %v735, %v793
        %795 = vst [vmem:[%s340] sm:$0x1] %v794
        %796 = vst [vmem:[%s346] sm:$0x1] %v376
        %s797 = sand.u32 %s130, 1
        %s798 = scalar_lea.sflag [#allocation5], %s797
        %s799 = sand.u32 %s130, 1
        %s800 = scalar_lea.vmem [#allocation4], %s799
        %s801 = sand.u32 %s156, 1
        %s802 = scalar_lea.sflag [#allocation7], %s801
        %s803 = sand.u32 %s156, 1
        %s804 = scalar_lea.vmem [#allocation6], %s803
        // Predicated region
        $region113: #{tpu_custom_call.1} parent=103 // pred_check
          %p805 = pneg %p140
        $region114: #{tpu_custom_call.1} parent=103 // pred_check_branch
          %807 = sbr.rel (%p805) target = $region116
        $region115: #{tpu_custom_call.1} parent=103 // pred_region
          %s809 = ssub.s32 16, 16
          %810 = vsyncadd %s798, %s809
          %s811 = smul.addr %s23, 16
          %s812 = scalar_lea.hbm %s4, %s811
          %s814 = sshll.u32 %s800, 4
          %s815 = int_to_ptr.vmem [resolvable:$true] %s814
          %817 = dma.vmem_to_hbm [thread:$0]  %s815, 16, %s812, %s798
        $region116: #{tpu_custom_call.1} parent=103 // pred_fallthru
          _
        // Predicated region
        $region117: #{tpu_custom_call.1} parent=103 // pred_check
          %p818 = pneg %p166
        $region118: #{tpu_custom_call.1} parent=103 // pred_check_branch
          %820 = sbr.rel (%p818) target = $region120
        $region119: #{tpu_custom_call.1} parent=103 // pred_region
          %s822 = ssub.s32 16, 16
          %823 = vsyncadd %s802, %s822
          %s824 = smul.addr %s23, 16
          %s825 = scalar_lea.hbm %s5, %s824
          %s827 = sshll.u32 %s804, 4
          %s828 = int_to_ptr.vmem [resolvable:$true] %s827
          %830 = dma.vmem_to_hbm [thread:$0]  %s828, 16, %s825, %s802
        $region120: #{tpu_custom_call.1} parent=103 // pred_fallthru
          _
      $region104: #{tpu_custom_call.1} parent=5 // pred_fallthru
        _
      %p831 = scmp.le.s32.totalorder 2, %s18
      // Predicated region
      $region121: #{tpu_custom_call.1} parent=5 // pred_check
        %p832 = pneg %p831
      $region122: #{tpu_custom_call.1} parent=5 // pred_check_branch
        %834 = sbr.rel (%p832) target = $region124
      $region123: #{tpu_custom_call.1} parent=5 // pred_region
        %s835 = ssub.s32 %s18, 2
        // Predicated region
        $region125: #{tpu_custom_call.1} parent=123 // pred_check
          %p836 = pneg %p146
        $region126: #{tpu_custom_call.1} parent=123 // pred_check_branch
          %838 = sbr.rel (%p836) target = $region128
        $region127: #{tpu_custom_call.1} parent=123 // pred_region
          %s839 = sand.u32 %s131, 1
          %s840 = scalar_lea.sflag [#allocation5], %s839
          %s841 = sand.u32 %s131, 1
          %s842 = scalar_lea.vmem [#allocation4], %s841
          %843 = dma.done %s840, 16
        $region128: #{tpu_custom_call.1} parent=123 // pred_fallthru
          _
        // Predicated region
        $region129: #{tpu_custom_call.1} parent=123 // pred_check
          %p844 = pneg %p172
        $region130: #{tpu_custom_call.1} parent=123 // pred_check_branch
          %846 = sbr.rel (%p844) target = $region132
        $region131: #{tpu_custom_call.1} parent=123 // pred_region
          %s847 = sand.u32 %s157, 1
          %s848 = scalar_lea.sflag [#allocation7], %s847
          %s849 = sand.u32 %s157, 1
          %s850 = scalar_lea.vmem [#allocation6], %s849
          %851 = dma.done %s848, 16
        $region132: #{tpu_custom_call.1} parent=123 // pred_fallthru
          _
      $region124: #{tpu_custom_call.1} parent=5 // pred_fallthru
        _
    $region6: #{tpu_custom_call.1} parent=1 // loop_footer
      %s22 = sadd.s32 1, %s18
    $region7: #{tpu_custom_call.1} parent=1 // loop_footer_branch
      %17 = sbr.rel target = $region3
    $region8: #{tpu_custom_call.1} parent=1 // loop_exit
      _
    %852 = vsyncpa [#allocation5], 1
    %s853 = scalar_lea.sflag [#allocation5], 1
    %854 = vsyncpa %s853, 1
    %855 = vsyncpa [#allocation7], 1
    %s856 = scalar_lea.sflag [#allocation7], 1
    %857 = vsyncpa %s856, 1

</llo_original>
